<compile_context>
chip_gen: v7x
topology: tpu7x:2x2x1
jax: 0.10.0
libtpu: 0.0.40
codegen_flags: <defaults>
</compile_context>

<pallas_src>
import functools

import jax
import jax.numpy as jnp
import numpy as np
from jax.experimental import pallas as pl
from jax.experimental.pallas import tpu as pltpu

BN_EPS = 1e-5
LANE = 128


def _round_up(x, m):
    return ((x + m - 1) // m) * m


def _gelu_exact(x):
    # nn.GELU() default = exact erf formulation (f32 math)
    return x * 0.5 * (1.0 + jax.lax.erf(x * np.float32(1.0 / np.sqrt(2.0))))


# ----------------------------------------------------------------------------
# Pass 1: accumulate per-feature sum / sum-of-squares of x1 = x @ W1 + b1
# (output blocks are VMEM-resident accumulators across the "arbitrary" axis)
# ----------------------------------------------------------------------------
def bn_stats_kernel(x_ref, w1_ref, b1_ref, sum_ref, sumsq_ref):
    @pl.when(pl.program_id(0) == 0)
    def _():
        sum_ref[...] = jnp.zeros_like(sum_ref)
        sumsq_ref[...] = jnp.zeros_like(sumsq_ref)

    x1 = jnp.dot(x_ref[...], w1_ref[...],
                 preferred_element_type=jnp.float32) + b1_ref[...]
    sum_ref[...] += jnp.sum(x1, axis=0, keepdims=True)
    sumsq_ref[...] += jnp.sum(x1 * x1, axis=0, keepdims=True)


# ----------------------------------------------------------------------------
# Pass 2: full forward for one batch tile (BN stats pre-folded into scale/shift)
# ----------------------------------------------------------------------------
def linked_ae_kernel(x_ref, w1_ref, b1_ref, bn_scale_ref, bn_shift_ref,
                     w2_ref, b2_ref, w5_ref, b5_ref, w6_ref, b6_ref, out_ref):
    # linear1: d -> d/2   (bf16 MXU, f32 accumulate)
    x1 = jnp.dot(x_ref[...], w1_ref[...],
                 preferred_element_type=jnp.float32) + b1_ref[...]
    # bn1 folded: gamma * (x - mean) * rstd + beta == x * scale + shift   (f32)
    x1 = x1 * bn_scale_ref[...] + bn_shift_ref[...]
    # gelu (exact erf, f32)
    x1 = _gelu_exact(x1)

    # linear2: d/2 -> d/4
    x2 = jnp.dot(x1.astype(jnp.bfloat16), w2_ref[...],
                 preferred_element_type=jnp.float32) + b2_ref[...]
    # linear5: d/4 -> d/2, residual with x1, gelu
    x5 = jnp.dot(x2.astype(jnp.bfloat16), w5_ref[...],
                 preferred_element_type=jnp.float32) + b5_ref[...]
    x5 = _gelu_exact(x5 + x1)
    # linear6: d/2 -> d
    x6 = jnp.dot(x5.astype(jnp.bfloat16), w6_ref[...],
                 preferred_element_type=jnp.float32) + b6_ref[...]
    out_ref[...] = x6.astype(out_ref.dtype)


# ----------------------------------------------------------------------------
# Wrapper: padding, grids, BlockSpecs, BN stat correction/folding
# ----------------------------------------------------------------------------
def linked_autoencoder(x, params):
    """x: (N, d) float32.  params: dict of (in,out) weights / (1,out) biases."""
    N, d = x.shape
    dh, dq = d // 2, d // 4

    # lane-dense padded feature dims
    d_pad = _round_up(d, LANE)
    dh_pad = _round_up(dh, LANE)
    dq_pad = _round_up(dq, LANE)

    # batch tile: >=8 sublanes, up to 512 rows, every tile full
    tn = max(8, min(512, _round_up(N, 8)))
    n_pad = _round_up(N, tn)
    grid = (n_pad // tn,)
    n_extra = n_pad - N

    def pad2(a, r, c, dtype):
        return jnp.pad(a, ((0, r - a.shape[0]), (0, c - a.shape[1]))).astype(dtype)

    bf16, f32 = jnp.bfloat16, jnp.float32
    x_p = pad2(x, n_pad, d_pad, bf16)
    w1_p = pad2(params["w1"], d_pad, dh_pad, bf16)
    b1_p = pad2(params["b1"], 1, dh_pad, f32)
    g1_p = pad2(params["gamma1"], 1, dh_pad, f32)
    be1_p = pad2(params["beta1"], 1, dh_pad, f32)
    w2_p = pad2(params["w2"], dh_pad, dq_pad, bf16)
    b2_p = pad2(params["b2"], 1, dq_pad, f32)
    w5_p = pad2(params["w5"], dq_pad, dh_pad, bf16)
    b5_p = pad2(params["b5"], 1, dh_pad, f32)
    w6_p = pad2(params["w6"], dh_pad, d_pad, bf16)
    b6_p = pad2(params["b6"], 1, d_pad, f32)

    # VMEM budget estimate (weights resident + double-buffered io + f32 temps)
    w_bytes = 2 * (d_pad * dh_pad + dh_pad * dq_pad + dq_pad * dh_pad + dh_pad * d_pad)
    vec_bytes = 4 * (4 * dh_pad + dq_pad + d_pad + dh_pad)
    io_bytes = 2 * (tn * d_pad * 2) + 2 * (tn * d_pad * 4)
    tmp_bytes = tn * (3 * dh_pad + dq_pad + d_pad) * 4
    est = w_bytes + vec_bytes + io_bytes + tmp_bytes
    vmem_limit = int(min(max(2 * est, 32 * 1024 * 1024), 64 * 1024 * 1024))

    x_spec = pl.BlockSpec((tn, d_pad), lambda i: (i, 0))
    const = lambda shape: pl.BlockSpec(shape, lambda i: (0, 0))

    # ---- pass 1: BN batch statistics -------------------------------------
    stats_ce = pl.CostEstimate(
        flops=2 * n_pad * d_pad * dh_pad + 3 * n_pad * dh_pad,
        transcendentals=0,
        bytes_accessed=int(n_pad * d_pad * 2 + d_pad * dh_pad * 2 + 3 * dh_pad * 4),
    )
    sums, sumsqs = pl.pallas_call(
        bn_stats_kernel,
        out_shape=(jax.ShapeDtypeStruct((1, dh_pad), f32),
                   jax.ShapeDtypeStruct((1, dh_pad), f32)),
        grid=grid,
        in_specs=[x_spec, const((d_pad, dh_pad)), const((1, dh_pad))],
        out_specs=(const((1, dh_pad)), const((1, dh_pad))),
        compiler_params=pltpu.CompilerParams(
            dimension_semantics=("arbitrary",),
            vmem_limit_bytes=vmem_limit),
        cost_estimate=stats_ce,
    )(x_p, w1_p, b1_p)

    # remove padded-row contributions exactly (padded x rows give x1 == b1),
    # then fold mean/var/gamma/beta into per-feature scale/shift (f32, XLA)
    s = sums - np.float32(n_extra) * b1_p
    ss = sumsqs - np.float32(n_extra) * (b1_p * b1_p)
    mean = s / np.float32(N)
    var = jnp.maximum(ss / np.float32(N) - mean * mean, 0.0)  # biased variance
    rstd = jax.lax.rsqrt(var + np.float32(BN_EPS))
    bn_scale = g1_p * rstd
    bn_shift = be1_p - mean * bn_scale

    # ---- pass 2: main forward ---------------------------------------------
    main_ce = pl.CostEstimate(
        flops=2 * n_pad * (d_pad * dh_pad + dh_pad * dq_pad
                           + dq_pad * dh_pad + dh_pad * d_pad),
        transcendentals=2 * n_pad * dh_pad,
        bytes_accessed=int(n_pad * d_pad * 2 + n_pad * d_pad * 4
                           + w_bytes + vec_bytes),
    )
    out_p = pl.pallas_call(
        linked_ae_kernel,
        out_shape=jax.ShapeDtypeStruct((n_pad, d_pad), f32),
        grid=grid,
        in_specs=[
            x_spec,
            const((d_pad, dh_pad)), const((1, dh_pad)),          # w1, b1
            const((1, dh_pad)), const((1, dh_pad)),              # bn scale, shift
            const((dh_pad, dq_pad)), const((1, dq_pad)),         # w2, b2
            const((dq_pad, dh_pad)), const((1, dh_pad)),         # w5, b5
            const((dh_pad, d_pad)), const((1, d_pad)),           # w6, b6
        ],
        out_specs=pl.BlockSpec((tn, d_pad), lambda i: (i, 0)),
        compiler_params=pltpu.CompilerParams(
            dimension_semantics=("parallel",),                   # megacore on v7x
            vmem_limit_bytes=vmem_limit),
        cost_estimate=main_ce,
    )(x_p, w1_p, b1_p, bn_scale, bn_shift, w2_p, b2_p, w5_p, b5_p, w6_p, b6_p)

    return out_p[:N, :d]


# ----------------------------------------------------------------------------
# Params + references
# ----------------------------------------------------------------------------
def init_params(key, d):
    """PyTorch nn.Linear default init, weights stored as (in, out)."""
    def linear(k, fan_in, fan_out):
        k_w, k_b = jax.random.split(k)
        bound = 1.0 / np.sqrt(fan_in)
        w = jax.random.uniform(k_w, (fan_in, fan_out), jnp.float32, -bound, bound)
        b = jax.random.uniform(k_b, (1, fan_out), jnp.float32, -bound, bound)
        return w, b

    k1, k2, k5, k6 = jax.random.split(key, 4)
    w1, b1 = linear(k1, d, d // 2)
    w2, b2 = linear(k2, d // 2, d // 4)
    w5, b5 = linear(k5, d // 4, d // 2)
    w6, b6 = linear(k6, d // 2, d)
    return dict(
        w1=w1, b1=b1,
        gamma1=jnp.ones((1, d // 2), jnp.float32),
        beta1=jnp.zeros((1, d // 2), jnp.float32),
        w2=w2, b2=b2, w5=w5, b5=b5, w6=w6, b6=b6,
    )


def reference_forward_f32(x, p):
    """Pure f32 reference (exact PyTorch training-mode semantics)."""
    x1 = x @ p["w1"] + p["b1"]
    mean = jnp.mean(x1, axis=0, keepdims=True)
    var = jnp.mean((x1 - mean) ** 2, axis=0, keepdims=True)
    x1 = (x1 - mean) / jnp.sqrt(var + BN_EPS) * p["gamma1"] + p["beta1"]
    x1 = jax.nn.gelu(x1, approximate=False)
    x2 = x1 @ p["w2"] + p["b2"]
    x5 = x2 @ p["w5"] + p["b5"] + x1
    x5 = jax.nn.gelu(x5, approximate=False)
    return x5 @ p["w6"] + p["b6"]


def reference_forward_bf16(x, p):
    """Reference that applies the same bf16 MXU casts as the kernel."""
    bf = lambda a: a.astype(jnp.bfloat16)
    dot = lambda a, b: jnp.dot(bf(a), bf(b), preferred_element_type=jnp.float32)
    x1 = dot(x, p["w1"]) + p["b1"]
    mean = jnp.mean(x1, axis=0, keepdims=True)
    var = jnp.mean((x1 - mean) ** 2, axis=0, keepdims=True)
    x1 = (x1 - mean) * jax.lax.rsqrt(var + BN_EPS) * p["gamma1"] + p["beta1"]
    x1 = jax.nn.gelu(x1, approximate=False)
    x2 = dot(x1, p["w2"]) + p["b2"]
    x5 = dot(x2, p["w5"]) + p["b5"] + x1
    x5 = jax.nn.gelu(x5, approximate=False)
    return dot(x5, p["w6"]) + p["b6"]


if __name__ == "__main__":
    key = jax.random.PRNGKey(0)
    k_x, k_p = jax.random.split(key)

    N, d = 8, 32  # small harness; kernel tiling targets realistic N / d
    x = jax.random.normal(k_x, (N, d), jnp.float32)
    params = init_params(k_p, d)

    fwd = jax.jit(linked_autoencoder)
    out = jax.block_until_ready(fwd(x, params))

    ref_bf16 = np.asarray(reference_forward_bf16(x, params))
    ref_f32 = np.asarray(reference_forward_f32(x, params))
    out_np = np.asarray(out)

    # tight check vs. a reference applying identical bf16 casts
    np.testing.assert_allclose(out_np, ref_bf16, rtol=2e-3, atol=2e-3)
    # loose sanity check vs. pure f32 math (bf16 MXU quantization error)
    np.testing.assert_allclose(out_np, ref_f32, rtol=6e-2, atol=6e-2)

    print("KERNEL_OK")
</pallas_src>

<mosaic_0001>
module attributes {stable_mosaic.version = 11 : i64} {
  func.func @bn_stats_kernel(%arg0: i32, %arg1: memref<8x128xbf16, #tpu.memory_space<vmem>>, %arg2: memref<128x128xbf16, #tpu.memory_space<vmem>>, %arg3: memref<1x128xf32, #tpu.memory_space<vmem>>, %arg4: memref<1x128xf32, #tpu.memory_space<vmem>>, %arg5: memref<1x128xf32, #tpu.memory_space<vmem>>) attributes {dimension_semantics = [#tpu.dimension_semantics<arbitrary>], iteration_bounds = array<i64: 1>, scalar_prefetch = 0 : i64, scratch_operands = 0 : i64, tpu.core_type = #tpu.core_type<tc>, window_params = [{transform_indices = @transform_0, window_bounds = array<i64: 8, 128>}, {pipeline_mode = #tpu.pipeline_mode<synchronous>, transform_indices = @transform_1, window_bounds = array<i64: 128, 128>}, {pipeline_mode = #tpu.pipeline_mode<synchronous>, transform_indices = @transform_2, window_bounds = array<i64: 1, 128>}, {pipeline_mode = #tpu.pipeline_mode<synchronous>, transform_indices = @transform_3, window_bounds = array<i64: 1, 128>}, {pipeline_mode = #tpu.pipeline_mode<synchronous>, transform_indices = @transform_4, window_bounds = array<i64: 1, 128>}]} {
    %c0_i32 = arith.constant 0 : i32
    %0 = arith.cmpi eq, %arg0, %c0_i32 : i32
    %1 = arith.extui %0 : i1 to i32
    %c0_i32_0 = arith.constant 0 : i32
    %2 = arith.cmpi ne, %1, %c0_i32_0 : i32
    scf.if %2 {
      %cst_16 = arith.constant 0.000000e+00 : f32
      %20 = vector.broadcast %cst_16 : f32 to vector<1x128xf32>
      %c0_17 = arith.constant 0 : index
      %c0_18 = arith.constant 0 : index
      %21 = vector.load %arg4[%c0_17, %c0_18] : memref<1x128xf32, #tpu.memory_space<vmem>>, vector<1x128xf32>
      tpu.vector_store %arg4[%c0_17, %c0_18], %20 {strides = array<i32>} : memref<1x128xf32, #tpu.memory_space<vmem>>, vector<1x128xf32>,
      %cst_19 = arith.constant 0.000000e+00 : f32
      %22 = vector.broadcast %cst_19 : f32 to vector<1x128xf32>
      %c0_20 = arith.constant 0 : index
      %c0_21 = arith.constant 0 : index
      %23 = vector.load %arg5[%c0_20, %c0_21] : memref<1x128xf32, #tpu.memory_space<vmem>>, vector<1x128xf32>
      tpu.vector_store %arg5[%c0_20, %c0_21], %22 {strides = array<i32>} : memref<1x128xf32, #tpu.memory_space<vmem>>, vector<1x128xf32>,
    } else {
    }
    %c0 = arith.constant 0 : index
    %c0_1 = arith.constant 0 : index
    %3 = vector.load %arg1[%c0, %c0_1] : memref<8x128xbf16, #tpu.memory_space<vmem>>, vector<8x128xbf16>
    %c0_2 = arith.constant 0 : index
    %c0_3 = arith.constant 0 : index
    %4 = vector.load %arg2[%c0_2, %c0_3] : memref<128x128xbf16, #tpu.memory_space<vmem>>, vector<128x128xbf16>
    %cst = arith.constant dense<0.000000e+00> : vector<8x128xf32>
    %5 = tpu.matmul %3, %4, %cst {dimension_numbers = #tpu.dot_dimension_numbers<[1], [0], [0], [1], [0, 0, 1, 1], [], []>} : vector<8x128xbf16>, vector<128x128xbf16>, vector<8x128xf32> -> vector<8x128xf32>
    %c0_4 = arith.constant 0 : index
    %c0_5 = arith.constant 0 : index
    %6 = vector.load %arg3[%c0_4, %c0_5] : memref<1x128xf32, #tpu.memory_space<vmem>>, vector<1x128xf32>
    %7 = vector.broadcast %6 : vector<1x128xf32> to vector<8x128xf32>
    %8 = arith.addf %5, %7 : vector<8x128xf32>
    %c0_6 = arith.constant 0 : index
    %c0_7 = arith.constant 0 : index
    %9 = vector.load %arg4[%c0_6, %c0_7] : memref<1x128xf32, #tpu.memory_space<vmem>>, vector<1x128xf32>
    %cst_8 = arith.constant dense<0.000000e+00> : vector<128xf32>
    %10 = vector.multi_reduction <add>, %8, %cst_8 [0] : vector<8x128xf32> to vector<128xf32>
    %11 = vector.shape_cast %10 : vector<128xf32> to vector<1x128xf32>
    %12 = arith.addf %9, %11 : vector<1x128xf32>
    %c0_9 = arith.constant 0 : index
    %c0_10 = arith.constant 0 : index
    %13 = vector.load %arg4[%c0_9, %c0_10] : memref<1x128xf32, #tpu.memory_space<vmem>>, vector<1x128xf32>
    tpu.vector_store %arg4[%c0_9, %c0_10], %12 {strides = array<i32>} : memref<1x128xf32, #tpu.memory_space<vmem>>, vector<1x128xf32>,
    %c0_11 = arith.constant 0 : index
    %c0_12 = arith.constant 0 : index
    %14 = vector.load %arg5[%c0_11, %c0_12] : memref<1x128xf32, #tpu.memory_space<vmem>>, vector<1x128xf32>
    %15 = arith.mulf %8, %8 : vector<8x128xf32>
    %cst_13 = arith.constant dense<0.000000e+00> : vector<128xf32>
    %16 = vector.multi_reduction <add>, %15, %cst_13 [0] : vector<8x128xf32> to vector<128xf32>
    %17 = vector.shape_cast %16 : vector<128xf32> to vector<1x128xf32>
    %18 = arith.addf %14, %17 : vector<1x128xf32>
    %c0_14 = arith.constant 0 : index
    %c0_15 = arith.constant 0 : index
    %19 = vector.load %arg5[%c0_14, %c0_15] : memref<1x128xf32, #tpu.memory_space<vmem>>, vector<1x128xf32>
    tpu.vector_store %arg5[%c0_14, %c0_15], %18 {strides = array<i32>} : memref<1x128xf32, #tpu.memory_space<vmem>>, vector<1x128xf32>,
    return
  }
  func.func @transform_0(%arg0: i32) -> (i32, i32) {
    %c0_i32 = arith.constant 0 : i32
    %c0_i32_0 = arith.constant 0 : i32
    return %arg0, %c0_i32 : i32, i32
  }
  func.func @transform_1(%arg0: i32) -> (i32, i32) {
    %c0_i32 = arith.constant 0 : i32
    %c0_i32_0 = arith.constant 0 : i32
    %c0_i32_1 = arith.constant 0 : i32
    return %c0_i32, %c0_i32_0 : i32, i32
  }
  func.func @transform_2(%arg0: i32) -> (i32, i32) {
    %c0_i32 = arith.constant 0 : i32
    %c0_i32_0 = arith.constant 0 : i32
    %c0_i32_1 = arith.constant 0 : i32
    return %c0_i32, %c0_i32_0 : i32, i32
  }
  func.func @transform_3(%arg0: i32) -> (i32, i32) {
    %c0_i32 = arith.constant 0 : i32
    %c0_i32_0 = arith.constant 0 : i32
    %c0_i32_1 = arith.constant 0 : i32
    return %c0_i32, %c0_i32_0 : i32, i32
  }
  func.func @transform_4(%arg0: i32) -> (i32, i32) {
    %c0_i32 = arith.constant 0 : i32
    %c0_i32_0 = arith.constant 0 : i32
    %c0_i32_1 = arith.constant 0 : i32
    return %c0_i32, %c0_i32_0 : i32, i32
  }
}

module attributes {stable_mosaic.version = 11 : i64} {
  func.func @linked_ae_kernel(%arg0: i32, %arg1: memref<8x128xbf16, #tpu.memory_space<vmem>>, %arg2: memref<128x128xbf16, #tpu.memory_space<vmem>>, %arg3: memref<1x128xf32, #tpu.memory_space<vmem>>, %arg4: memref<1x128xf32, #tpu.memory_space<vmem>>, %arg5: memref<1x128xf32, #tpu.memory_space<vmem>>, %arg6: memref<128x128xbf16, #tpu.memory_space<vmem>>, %arg7: memref<1x128xf32, #tpu.memory_space<vmem>>, %arg8: memref<128x128xbf16, #tpu.memory_space<vmem>>, %arg9: memref<1x128xf32, #tpu.memory_space<vmem>>, %arg10: memref<128x128xbf16, #tpu.memory_space<vmem>>, %arg11: memref<1x128xf32, #tpu.memory_space<vmem>>, %arg12: memref<8x128xf32, #tpu.memory_space<vmem>>) attributes {dimension_semantics = [#tpu.dimension_semantics<parallel>], iteration_bounds = array<i64: 1>, scalar_prefetch = 0 : i64, scratch_operands = 0 : i64, tpu.core_type = #tpu.core_type<tc>, window_params = [{transform_indices = @transform_0, window_bounds = array<i64: 8, 128>}, {pipeline_mode = #tpu.pipeline_mode<synchronous>, transform_indices = @transform_1, window_bounds = array<i64: 128, 128>}, {pipeline_mode = #tpu.pipeline_mode<synchronous>, transform_indices = @transform_2, window_bounds = array<i64: 1, 128>}, {pipeline_mode = #tpu.pipeline_mode<synchronous>, transform_indices = @transform_3, window_bounds = array<i64: 1, 128>}, {pipeline_mode = #tpu.pipeline_mode<synchronous>, transform_indices = @transform_4, window_bounds = array<i64: 1, 128>}, {pipeline_mode = #tpu.pipeline_mode<synchronous>, transform_indices = @transform_5, window_bounds = array<i64: 128, 128>}, {pipeline_mode = #tpu.pipeline_mode<synchronous>, transform_indices = @transform_6, window_bounds = array<i64: 1, 128>}, {pipeline_mode = #tpu.pipeline_mode<synchronous>, transform_indices = @transform_7, window_bounds = array<i64: 128, 128>}, {pipeline_mode = #tpu.pipeline_mode<synchronous>, transform_indices = @transform_8, window_bounds = array<i64: 1, 128>}, {pipeline_mode = #tpu.pipeline_mode<synchronous>, transform_indices = @transform_9, window_bounds = array<i64: 128, 128>}, {pipeline_mode = #tpu.pipeline_mode<synchronous>, transform_indices = @transform_10, window_bounds = array<i64: 1, 128>}, {transform_indices = @transform_11, window_bounds = array<i64: 8, 128>}]} {
    %c0 = arith.constant 0 : index
    %c0_0 = arith.constant 0 : index
    %0 = vector.load %arg1[%c0, %c0_0] : memref<8x128xbf16, #tpu.memory_space<vmem>>, vector<8x128xbf16>
    %c0_1 = arith.constant 0 : index
    %c0_2 = arith.constant 0 : index
    %1 = vector.load %arg2[%c0_1, %c0_2] : memref<128x128xbf16, #tpu.memory_space<vmem>>, vector<128x128xbf16>
    %cst = arith.constant dense<0.000000e+00> : vector<8x128xf32>
    %2 = tpu.matmul %0, %1, %cst {dimension_numbers = #tpu.dot_dimension_numbers<[1], [0], [0], [1], [0, 0, 1, 1], [], []>} : vector<8x128xbf16>, vector<128x128xbf16>, vector<8x128xf32> -> vector<8x128xf32>
    %c0_3 = arith.constant 0 : index
    %c0_4 = arith.constant 0 : index
    %3 = vector.load %arg3[%c0_3, %c0_4] : memref<1x128xf32, #tpu.memory_space<vmem>>, vector<1x128xf32>
    %4 = vector.broadcast %3 : vector<1x128xf32> to vector<8x128xf32>
    %5 = arith.addf %2, %4 : vector<8x128xf32>
    %c0_5 = arith.constant 0 : index
    %c0_6 = arith.constant 0 : index
    %6 = vector.load %arg4[%c0_5, %c0_6] : memref<1x128xf32, #tpu.memory_space<vmem>>, vector<1x128xf32>
    %7 = vector.broadcast %6 : vector<1x128xf32> to vector<8x128xf32>
    %8 = arith.mulf %5, %7 : vector<8x128xf32>
    %c0_7 = arith.constant 0 : index
    %c0_8 = arith.constant 0 : index
    %9 = vector.load %arg5[%c0_7, %c0_8] : memref<1x128xf32, #tpu.memory_space<vmem>>, vector<1x128xf32>
    %10 = vector.broadcast %9 : vector<1x128xf32> to vector<8x128xf32>
    %11 = arith.addf %8, %10 : vector<8x128xf32>
    %cst_9 = arith.constant 5.000000e-01 : f32
    %12 = vector.broadcast %cst_9 : f32 to vector<8x128xf32>
    %13 = arith.mulf %11, %12 : vector<8x128xf32>
    %cst_10 = arith.constant 0.707106769 : f32
    %14 = vector.broadcast %cst_10 : f32 to vector<8x128xf32>
    %15 = arith.mulf %11, %14 : vector<8x128xf32>
    %16 = math.erf %15 : vector<8x128xf32>
    %cst_11 = arith.constant 1.000000e+00 : f32
    %17 = vector.broadcast %cst_11 : f32 to vector<8x128xf32>
    %18 = arith.addf %17, %16 : vector<8x128xf32>
    %19 = arith.mulf %13, %18 : vector<8x128xf32>
    %20 = arith.truncf %19 : vector<8x128xf32> to vector<8x128xbf16>
    %c0_12 = arith.constant 0 : index
    %c0_13 = arith.constant 0 : index
    %21 = vector.load %arg6[%c0_12, %c0_13] : memref<128x128xbf16, #tpu.memory_space<vmem>>, vector<128x128xbf16>
    %cst_14 = arith.constant dense<0.000000e+00> : vector<8x128xf32>
    %22 = tpu.matmul %20, %21, %cst_14 {dimension_numbers = #tpu.dot_dimension_numbers<[1], [0], [0], [1], [0, 0, 1, 1], [], []>} : vector<8x128xbf16>, vector<128x128xbf16>, vector<8x128xf32> -> vector<8x128xf32>
    %c0_15 = arith.constant 0 : index
    %c0_16 = arith.constant 0 : index
    %23 = vector.load %arg7[%c0_15, %c0_16] : memref<1x128xf32, #tpu.memory_space<vmem>>, vector<1x128xf32>
    %24 = vector.broadcast %23 : vector<1x128xf32> to vector<8x128xf32>
    %25 = arith.addf %22, %24 : vector<8x128xf32>
    %26 = arith.truncf %25 : vector<8x128xf32> to vector<8x128xbf16>
    %c0_17 = arith.constant 0 : index
    %c0_18 = arith.constant 0 : index
    %27 = vector.load %arg8[%c0_17, %c0_18] : memref<128x128xbf16, #tpu.memory_space<vmem>>, vector<128x128xbf16>
    %cst_19 = arith.constant dense<0.000000e+00> : vector<8x128xf32>
    %28 = tpu.matmul %26, %27, %cst_19 {dimension_numbers = #tpu.dot_dimension_numbers<[1], [0], [0], [1], [0, 0, 1, 1], [], []>} : vector<8x128xbf16>, vector<128x128xbf16>, vector<8x128xf32> -> vector<8x128xf32>
    %c0_20 = arith.constant 0 : index
    %c0_21 = arith.constant 0 : index
    %29 = vector.load %arg9[%c0_20, %c0_21] : memref<1x128xf32, #tpu.memory_space<vmem>>, vector<1x128xf32>
    %30 = vector.broadcast %29 : vector<1x128xf32> to vector<8x128xf32>
    %31 = arith.addf %28, %30 : vector<8x128xf32>
    %32 = arith.addf %31, %19 : vector<8x128xf32>
    %cst_22 = arith.constant 5.000000e-01 : f32
    %33 = vector.broadcast %cst_22 : f32 to vector<8x128xf32>
    %34 = arith.mulf %32, %33 : vector<8x128xf32>
    %cst_23 = arith.constant 0.707106769 : f32
    %35 = vector.broadcast %cst_23 : f32 to vector<8x128xf32>
    %36 = arith.mulf %32, %35 : vector<8x128xf32>
    %37 = math.erf %36 : vector<8x128xf32>
    %cst_24 = arith.constant 1.000000e+00 : f32
    %38 = vector.broadcast %cst_24 : f32 to vector<8x128xf32>
    %39 = arith.addf %38, %37 : vector<8x128xf32>
    %40 = arith.mulf %34, %39 : vector<8x128xf32>
    %41 = arith.truncf %40 : vector<8x128xf32> to vector<8x128xbf16>
    %c0_25 = arith.constant 0 : index
    %c0_26 = arith.constant 0 : index
    %42 = vector.load %arg10[%c0_25, %c0_26] : memref<128x128xbf16, #tpu.memory_space<vmem>>, vector<128x128xbf16>
    %cst_27 = arith.constant dense<0.000000e+00> : vector<8x128xf32>
    %43 = tpu.matmul %41, %42, %cst_27 {dimension_numbers = #tpu.dot_dimension_numbers<[1], [0], [0], [1], [0, 0, 1, 1], [], []>} : vector<8x128xbf16>, vector<128x128xbf16>, vector<8x128xf32> -> vector<8x128xf32>
    %c0_28 = arith.constant 0 : index
    %c0_29 = arith.constant 0 : index
    %44 = vector.load %arg11[%c0_28, %c0_29] : memref<1x128xf32, #tpu.memory_space<vmem>>, vector<1x128xf32>
    %45 = vector.broadcast %44 : vector<1x128xf32> to vector<8x128xf32>
    %46 = arith.addf %43, %45 : vector<8x128xf32>
    %c0_30 = arith.constant 0 : index
    %c0_31 = arith.constant 0 : index
    %47 = vector.load %arg12[%c0_30, %c0_31] : memref<8x128xf32, #tpu.memory_space<vmem>>, vector<8x128xf32>
    tpu.vector_store %arg12[%c0_30, %c0_31], %46 {strides = array<i32>} : memref<8x128xf32, #tpu.memory_space<vmem>>, vector<8x128xf32>,
    return
  }
  func.func @transform_0(%arg0: i32) -> (i32, i32) {
    %c0_i32 = arith.constant 0 : i32
    %c0_i32_0 = arith.constant 0 : i32
    return %arg0, %c0_i32 : i32, i32
  }
  func.func @transform_1(%arg0: i32) -> (i32, i32) {
    %c0_i32 = arith.constant 0 : i32
    %c0_i32_0 = arith.constant 0 : i32
    %c0_i32_1 = arith.constant 0 : i32
    return %c0_i32, %c0_i32_0 : i32, i32
  }
  func.func @transform_2(%arg0: i32) -> (i32, i32) {
    %c0_i32 = arith.constant 0 : i32
    %c0_i32_0 = arith.constant 0 : i32
    %c0_i32_1 = arith.constant 0 : i32
    return %c0_i32, %c0_i32_0 : i32, i32
  }
  func.func @transform_3(%arg0: i32) -> (i32, i32) {
    %c0_i32 = arith.constant 0 : i32
    %c0_i32_0 = arith.constant 0 : i32
    %c0_i32_1 = arith.constant 0 : i32
    return %c0_i32, %c0_i32_0 : i32, i32
  }
  func.func @transform_4(%arg0: i32) -> (i32, i32) {
    %c0_i32 = arith.constant 0 : i32
    %c0_i32_0 = arith.constant 0 : i32
    %c0_i32_1 = arith.constant 0 : i32
    return %c0_i32, %c0_i32_0 : i32, i32
  }
  func.func @transform_5(%arg0: i32) -> (i32, i32) {
    %c0_i32 = arith.constant 0 : i32
    %c0_i32_0 = arith.constant 0 : i32
    %c0_i32_1 = arith.constant 0 : i32
    return %c0_i32, %c0_i32_0 : i32, i32
  }
  func.func @transform_6(%arg0: i32) -> (i32, i32) {
    %c0_i32 = arith.constant 0 : i32
    %c0_i32_0 = arith.constant 0 : i32
    %c0_i32_1 = arith.constant 0 : i32
    return %c0_i32, %c0_i32_0 : i32, i32
  }
  func.func @transform_7(%arg0: i32) -> (i32, i32) {
    %c0_i32 = arith.constant 0 : i32
    %c0_i32_0 = arith.constant 0 : i32
    %c0_i32_1 = arith.constant 0 : i32
    return %c0_i32, %c0_i32_0 : i32, i32
  }
  func.func @transform_8(%arg0: i32) -> (i32, i32) {
    %c0_i32 = arith.constant 0 : i32
    %c0_i32_0 = arith.constant 0 : i32
    %c0_i32_1 = arith.constant 0 : i32
    return %c0_i32, %c0_i32_0 : i32, i32
  }
  func.func @transform_9(%arg0: i32) -> (i32, i32) {
    %c0_i32 = arith.constant 0 : i32
    %c0_i32_0 = arith.constant 0 : i32
    %c0_i32_1 = arith.constant 0 : i32
    return %c0_i32, %c0_i32_0 : i32, i32
  }
  func.func @transform_10(%arg0: i32) -> (i32, i32) {
    %c0_i32 = arith.constant 0 : i32
    %c0_i32_0 = arith.constant 0 : i32
    %c0_i32_1 = arith.constant 0 : i32
    return %c0_i32, %c0_i32_0 : i32, i32
  }
  func.func @transform_11(%arg0: i32) -> (i32, i32) {
    %c0_i32 = arith.constant 0 : i32
    %c0_i32_0 = arith.constant 0 : i32
    return %arg0, %c0_i32 : i32, i32
  }
}

</mosaic_0001>

<llo_original>
// kernel: linked_autoencoder.2
$region0: #{linked_autoencoder.2}
  #allocation0 [shape = 'u32[]', space=smem, size = 0x4, offset = 0x4, fixed_abs, tag = 'smem constant byte address 0x4 - core index']
  #allocation1 [shape = 'u32[144,128]{1,0:T(1,128)}', space=vmem, size = 0x12000, scoped, tag = 'internal scratch']
  %s0 = inlined_call_operand.vmem [shape: bf16[8,128], index: 0, kind: input, shape index: {}]
  %s1 = inlined_call_operand.vmem [shape: bf16[128,128], index: 1, kind: input, shape index: {}]
  %s2 = inlined_call_operand.vmem [shape: f32[1,128], index: 2, kind: input, shape index: {}]
  %s3 = inlined_call_operand.vmem [shape: f32[1,128], index: 3, kind: output, shape index: {0}]
  %s4 = inlined_call_operand.vmem [shape: f32[1,128], index: 4, kind: output, shape index: {1}]
  %5 = xla_tuple %s3, %s4
  %s6 = sld [smem:[#allocation0]]
  $region34: #{linked_autoencoder.2} parent=0
    _
  %s8 = ssub.s32 1, %s6
  %s9 = scalar_select 0, %s8, %s6
  // Predicated region
  $region2: #{linked_autoencoder.2} parent=0 // pred_check
    _
  $region3: #{linked_autoencoder.2} parent=0 // pred_check_branch
    %11 = sbr.rel (0) target = $region5
  $region4: #{linked_autoencoder.2} parent=0 // pred_region
    _
  $region5: #{linked_autoencoder.2} parent=0 // pred_fallthru
    _
  // Predicated region
  $region6: #{linked_autoencoder.2} parent=0 // pred_check
    _
  $region7: #{linked_autoencoder.2} parent=0 // pred_check_branch
    %13 = sbr.rel (0) target = $region9
  $region8: #{linked_autoencoder.2} parent=0 // pred_region
    _
  $region9: #{linked_autoencoder.2} parent=0 // pred_fallthru
    _
  // Predicated region
  $region10: #{linked_autoencoder.2} parent=0 // pred_check
    _
  $region11: #{linked_autoencoder.2} parent=0 // pred_check_branch
    %15 = sbr.rel (0) target = $region13
  $region12: #{linked_autoencoder.2} parent=0 // pred_region
    _
  $region13: #{linked_autoencoder.2} parent=0 // pred_fallthru
    _
  %p17 = scmp.eq.s32.totalorder 0, 0
  // Predicated region
  $region14: #{linked_autoencoder.2} parent=0 // pred_check
    %p18 = pneg %p17
  $region15: #{linked_autoencoder.2} parent=0 // pred_check_branch
    %20 = sbr.rel (%p18) target = $region17
  $region16: #{linked_autoencoder.2} parent=0 // pred_region
    %21 = vst [vmem:[%s3] sm:$0x1] 0.0
    %22 = vst [vmem:[%s4] sm:$0x1] 0.0
  $region17: #{linked_autoencoder.2} parent=0 // pred_fallthru
    _
  %v23 = vld [vmem:[%s0] sm:$0xf]
  %v24 = vld [vmem:[%s1] sm:$0xf]
  %v25 = vld [vmem:[%s1 + $0x4] sm:$0xf]
  %v26 = vld [vmem:[%s1 + $0x8] sm:$0xf]
  %v27 = vld [vmem:[%s1 + $0xc] sm:$0xf]
  %v28 = vld [vmem:[%s1 + $0x10] sm:$0xf]
  %v29 = vld [vmem:[%s1 + $0x14] sm:$0xf]
  %v30 = vld [vmem:[%s1 + $0x18] sm:$0xf]
  %v31 = vld [vmem:[%s1 + $0x1c] sm:$0xf]
  %v32 = vld [vmem:[%s1 + $0x20] sm:$0xf]
  %v33 = vld [vmem:[%s1 + $0x24] sm:$0xf]
  %v34 = vld [vmem:[%s1 + $0x28] sm:$0xf]
  %v35 = vld [vmem:[%s1 + $0x2c] sm:$0xf]
  %v36 = vld [vmem:[%s1 + $0x30] sm:$0xf]
  %v37 = vld [vmem:[%s1 + $0x34] sm:$0xf]
  %v38 = vld [vmem:[%s1 + $0x38] sm:$0xf]
  %v39 = vld [vmem:[%s1 + $0x3c] sm:$0xf]
  %v40 = vld [vmem:[%s2] sm:$0x1]
  %v42 = vlaneseq
  %v43 = vshrl.u32 %v42, 7
  %v44 = vsub.s32 0, %v43
  %v45 = vrot.slane %v40, %v44
  %v63 = vunpack.c.l.b16 %v24
  %v64 = vunpack.c.l.b16 %v25
  %v65 = vunpack.c.l.b16 %v26
  %v66 = vunpack.c.l.b16 %v27
  %v67 = vunpack.c.l.b16 %v28
  %v68 = vunpack.c.l.b16 %v29
  %v69 = vunpack.c.l.b16 %v30
  %v70 = vunpack.c.l.b16 %v31
  %v71 = vunpack.c.l.b16 %v32
  %v72 = vunpack.c.l.b16 %v33
  %v73 = vunpack.c.l.b16 %v34
  %v74 = vunpack.c.l.b16 %v35
  %v75 = vunpack.c.l.b16 %v36
  %v76 = vunpack.c.l.b16 %v37
  %v77 = vunpack.c.l.b16 %v38
  %v78 = vunpack.c.l.b16 %v39
  %v79 = vpack.c.b16 %v64, %v63
  %v80 = vpack.c.b16 %v66, %v65
  %v81 = vpack.c.b16 %v68, %v67
  %v82 = vpack.c.b16 %v70, %v69
  %v83 = vpack.c.b16 %v72, %v71
  %v84 = vpack.c.b16 %v74, %v73
  %v85 = vpack.c.b16 %v76, %v75
  %v86 = vpack.c.b16 %v78, %v77
  %95 = vmatprep.subr.bf16.mxu0 0
  %96 = vmatpush1.bf16.msra.mxu0 %v79
  %97 = vmatprep.subr.bf16.mxu0 0
  %98 = vmatpush1.bf16.msra.mxu0 %v80
  %99 = vmatprep.subr.bf16.mxu0 0
  %100 = vmatpush1.bf16.msra.mxu0 %v81
  %101 = vmatprep.subr.bf16.mxu0 0
  %102 = vmatpush1.bf16.msra.mxu0 %v82
  %103 = vmatprep.subr.bf16.mxu0 0
  %104 = vmatpush1.bf16.msra.mxu0 %v83
  %105 = vmatprep.subr.bf16.mxu0 0
  %106 = vmatpush1.bf16.msra.mxu0 %v84
  %107 = vmatprep.subr.bf16.mxu0 0
  %108 = vmatpush1.bf16.msra.mxu0 %v85
  %109 = vmatprep.subr.bf16.mxu0 0
  %110 = vmatpush1.bf16.msra.mxu0 %v86
  %111 = vmatprep.subr.bf16.mxu0 0
  %112 = vmatpush1.bf16.msra.mxu0 0
  %113 = vmatprep.subr.bf16.mxu0 0
  %114 = vmatpush1.bf16.msra.mxu0 0
  %115 = vmatprep.subr.bf16.mxu0 0
  %116 = vmatpush1.bf16.msra.mxu0 0
  %117 = vmatprep.subr.bf16.mxu0 0
  %118 = vmatpush1.bf16.msra.mxu0 0
  %119 = vmatprep.subr.bf16.mxu0 0
  %120 = vmatpush1.bf16.msra.mxu0 0
  %121 = vmatprep.subr.bf16.mxu0 0
  %122 = vmatpush1.bf16.msra.mxu0 0
  %123 = vmatprep.subr.bf16.mxu0 0
  %124 = vmatpush1.bf16.msra.mxu0 0
  %125 = vmatprep.subr.bf16.mxu0 0
  %126 = vmatpush1.bf16.msra.mxu0 0
  %127 = vmatprep.mubr.bf16.mxu0 0
  %128 = vmatmul.mubr.bf16.gmra.mrb[0].mxu0 %v23
  %v129 = vpop.f32.mrb[0].mxu0
  %v130 = vadd.f32 %v45, %v129
  %v131 = vpop.f32.mrb[0].mxu0
  %v132 = vpop.f32.mrb[0].mxu0
  %v133 = vpop.f32.mrb[0].mxu0
  %134 = vdwg.mxu0
  %v135 = vld [vmem:[%s3] sm:$0x1]
  %v136 = vrot.slane %v130, 4
  %v137 = vadd.f32 %v130, %v136
  %v138 = vrot.slane %v137, 2
  %v139 = vadd.f32 %v137, %v138
  %v140 = vrot.slane %v139, 1
  %v141 = vadd.f32 %v139, %v140
  %v142 = vadd.f32 %v135, %v141
  %143 = vst [vmem:[%s3] sm:$0x1] %v142
  %v144 = vld [vmem:[%s4] sm:$0x1]
  %v145 = vmul.f32 %v130, %v130
  %v146 = vrot.slane %v145, 4
  %v147 = vadd.f32 %v145, %v146
  %v148 = vrot.slane %v147, 2
  %v149 = vadd.f32 %v147, %v148
  %v150 = vrot.slane %v149, 1
  %v151 = vadd.f32 %v149, %v150
  %v152 = vadd.f32 %v144, %v151
  %153 = vst [vmem:[%s4] sm:$0x1] %v152
  // Predicated region
  $region18: #{linked_autoencoder.2} parent=0 // pred_check
    _
  $region19: #{linked_autoencoder.2} parent=0 // pred_check_branch
    %155 = sbr.rel (0) target = $region21
  $region20: #{linked_autoencoder.2} parent=0 // pred_region
    _
  $region21: #{linked_autoencoder.2} parent=0 // pred_fallthru
    _
  // Predicated region
  $region22: #{linked_autoencoder.2} parent=0 // pred_check
    _
  $region23: #{linked_autoencoder.2} parent=0 // pred_check_branch
    %157 = sbr.rel (0) target = $region25
  $region24: #{linked_autoencoder.2} parent=0 // pred_region
    _
  $region25: #{linked_autoencoder.2} parent=0 // pred_fallthru
    _
  // Predicated region
  $region26: #{linked_autoencoder.2} parent=0 // pred_check
    _
  $region27: #{linked_autoencoder.2} parent=0 // pred_check_branch
    %159 = sbr.rel (0) target = $region29
  $region28: #{linked_autoencoder.2} parent=0 // pred_region
    _
  $region29: #{linked_autoencoder.2} parent=0 // pred_fallthru
    _
  // Predicated region
  $region30: #{linked_autoencoder.2} parent=0 // pred_check
    _
  $region31: #{linked_autoencoder.2} parent=0 // pred_check_branch
    %161 = sbr.rel (0) target = $region33
  $region32: #{linked_autoencoder.2} parent=0 // pred_region
    _
  $region33: #{linked_autoencoder.2} parent=0 // pred_fallthru
    _

// kernel: linked_autoencoder.3
$region0: #{linked_autoencoder.3}
  #allocation0 [shape = 'u32[]', space=smem, size = 0x4, offset = 0x4, fixed_abs, tag = 'smem constant byte address 0x4 - core index']
  #allocation1 [shape = 'u32[144,128]{1,0:T(1,128)}', space=vmem, size = 0x12000, scoped, tag = 'internal scratch']
  %s0 = inlined_call_operand.vmem [shape: bf16[8,128], index: 0, kind: input, shape index: {}]
  %s1 = inlined_call_operand.vmem [shape: bf16[128,128], index: 1, kind: input, shape index: {}]
  %s2 = inlined_call_operand.vmem [shape: f32[1,128], index: 2, kind: input, shape index: {}]
  %s3 = inlined_call_operand.vmem [shape: f32[1,128], index: 3, kind: input, shape index: {}]
  %s4 = inlined_call_operand.vmem [shape: f32[1,128], index: 4, kind: input, shape index: {}]
  %s5 = inlined_call_operand.vmem [shape: bf16[128,128], index: 5, kind: input, shape index: {}]
  %s6 = inlined_call_operand.vmem [shape: f32[1,128], index: 6, kind: input, shape index: {}]
  %s7 = inlined_call_operand.vmem [shape: bf16[128,128], index: 7, kind: input, shape index: {}]
  %s8 = inlined_call_operand.vmem [shape: f32[1,128], index: 8, kind: input, shape index: {}]
  %s9 = inlined_call_operand.vmem [shape: bf16[128,128], index: 9, kind: input, shape index: {}]
  %s10 = inlined_call_operand.vmem [shape: f32[1,128], index: 10, kind: input, shape index: {}]
  %s11 = inlined_call_operand.hbm [shape: f32[8,128], index: 11, kind: output, shape index: {}]
  %s12 = sld [smem:[#allocation0]]
  $region54: #{linked_autoencoder.3} parent=0
    _
  %s14 = ssub.s32 1, %s12
  %s15 = scalar_select 0, %s14, %s12
  $region1: #{linked_autoencoder.3} parent=0
    #allocation2 [shape = 'u8[4096]{0}', space=vmem, size = 0x1000, scoped, tag = 'output window, operand 0, single buffered']
    #allocation3 [shape = 's32[1]{0}', space=sflag, size = 0x4, scoped, tag = 'scoped memory for linked_autoencoder.3']
    %16 = vsyncpa [#allocation3], 0
    // Predicated region
    $region2: #{linked_autoencoder.3} parent=1 // pred_check
      _
    $region3: #{linked_autoencoder.3} parent=1 // pred_check_branch
      %18 = sbr.rel (0) target = $region5
    $region4: #{linked_autoencoder.3} parent=1 // pred_region
      _
    $region5: #{linked_autoencoder.3} parent=1 // pred_fallthru
      _
    // Predicated region
    $region6: #{linked_autoencoder.3} parent=1 // pred_check
      _
    $region7: #{linked_autoencoder.3} parent=1 // pred_check_branch
      %20 = sbr.rel (0) target = $region9
    $region8: #{linked_autoencoder.3} parent=1 // pred_region
      _
    $region9: #{linked_autoencoder.3} parent=1 // pred_fallthru
      _
    // Predicated region
    $region10: #{linked_autoencoder.3} parent=1 // pred_check
      _
    $region11: #{linked_autoencoder.3} parent=1 // pred_check_branch
      %22 = sbr.rel (0) target = $region13
    $region12: #{linked_autoencoder.3} parent=1 // pred_region
      _
    $region13: #{linked_autoencoder.3} parent=1 // pred_fallthru
      _
    // Predicated region
    $region14: #{linked_autoencoder.3} parent=1 // pred_check
      _
    $region15: #{linked_autoencoder.3} parent=1 // pred_check_branch
      %24 = sbr.rel (0) target = $region17
    $region16: #{linked_autoencoder.3} parent=1 // pred_region
      _
    $region17: #{linked_autoencoder.3} parent=1 // pred_fallthru
      _
    // Predicated region
    $region18: #{linked_autoencoder.3} parent=1 // pred_check
      _
    $region19: #{linked_autoencoder.3} parent=1 // pred_check_branch
      %26 = sbr.rel (0) target = $region21
    $region20: #{linked_autoencoder.3} parent=1 // pred_region
      _
    $region21: #{linked_autoencoder.3} parent=1 // pred_fallthru
      _
    // Predicated region
    $region22: #{linked_autoencoder.3} parent=1 // pred_check
      _
    $region23: #{linked_autoencoder.3} parent=1 // pred_check_branch
      %28 = sbr.rel (0) target = $region25
    $region24: #{linked_autoencoder.3} parent=1 // pred_region
      _
    $region25: #{linked_autoencoder.3} parent=1 // pred_fallthru
      _
    // Predicated region
    $region26: #{linked_autoencoder.3} parent=1 // pred_check
      _
    $region27: #{linked_autoencoder.3} parent=1 // pred_check_branch
      %30 = sbr.rel (0) target = $region29
    $region28: #{linked_autoencoder.3} parent=1 // pred_region
      _
    $region29: #{linked_autoencoder.3} parent=1 // pred_fallthru
      _
    // Predicated region
    $region30: #{linked_autoencoder.3} parent=1 // pred_check
      _
    $region31: #{linked_autoencoder.3} parent=1 // pred_check_branch
      %32 = sbr.rel (0) target = $region33
    $region32: #{linked_autoencoder.3} parent=1 // pred_region
      _
    $region33: #{linked_autoencoder.3} parent=1 // pred_fallthru
      _
    // Predicated region
    $region34: #{linked_autoencoder.3} parent=1 // pred_check
      _
    $region35: #{linked_autoencoder.3} parent=1 // pred_check_branch
      %34 = sbr.rel (0) target = $region37
    $region36: #{linked_autoencoder.3} parent=1 // pred_region
      _
    $region37: #{linked_autoencoder.3} parent=1 // pred_fallthru
      _
    // Predicated region
    $region38: #{linked_autoencoder.3} parent=1 // pred_check
      _
    $region39: #{linked_autoencoder.3} parent=1 // pred_check_branch
      %36 = sbr.rel (0) target = $region41
    $region40: #{linked_autoencoder.3} parent=1 // pred_region
      _
    $region41: #{linked_autoencoder.3} parent=1 // pred_fallthru
      _
    // Predicated region
    $region42: #{linked_autoencoder.3} parent=1 // pred_check
      _
    $region43: #{linked_autoencoder.3} parent=1 // pred_check_branch
      %38 = sbr.rel (0) target = $region45
    $region44: #{linked_autoencoder.3} parent=1 // pred_region
      _
    $region45: #{linked_autoencoder.3} parent=1 // pred_fallthru
      _
    %v40 = vld [vmem:[%s0] sm:$0xf]
    %v41 = vld [vmem:[%s1] sm:$0xf]
    %v42 = vld [vmem:[%s1 + $0x4] sm:$0xf]
    %v43 = vld [vmem:[%s1 + $0x8] sm:$0xf]
    %v44 = vld [vmem:[%s1 + $0xc] sm:$0xf]
    %v45 = vld [vmem:[%s1 + $0x10] sm:$0xf]
    %v46 = vld [vmem:[%s1 + $0x14] sm:$0xf]
    %v47 = vld [vmem:[%s1 + $0x18] sm:$0xf]
    %v48 = vld [vmem:[%s1 + $0x1c] sm:$0xf]
    %v49 = vld [vmem:[%s1 + $0x20] sm:$0xf]
    %v50 = vld [vmem:[%s1 + $0x24] sm:$0xf]
    %v51 = vld [vmem:[%s1 + $0x28] sm:$0xf]
    %v52 = vld [vmem:[%s1 + $0x2c] sm:$0xf]
    %v53 = vld [vmem:[%s1 + $0x30] sm:$0xf]
    %v54 = vld [vmem:[%s1 + $0x34] sm:$0xf]
    %v55 = vld [vmem:[%s1 + $0x38] sm:$0xf]
    %v56 = vld [vmem:[%s1 + $0x3c] sm:$0xf]
    %v57 = vld [vmem:[%s2] sm:$0x1]
    %v59 = vlaneseq
    %v60 = vshrl.u32 %v59, 7
    %v61 = vsub.s32 0, %v60
    %v62 = vrot.slane %v57, %v61
    %v80 = vunpack.c.l.b16 %v41
    %v81 = vunpack.c.l.b16 %v42
    %v82 = vunpack.c.l.b16 %v43
    %v83 = vunpack.c.l.b16 %v44
    %v84 = vunpack.c.l.b16 %v45
    %v85 = vunpack.c.l.b16 %v46
    %v86 = vunpack.c.l.b16 %v47
    %v87 = vunpack.c.l.b16 %v48
    %v88 = vunpack.c.l.b16 %v49
    %v89 = vunpack.c.l.b16 %v50
    %v90 = vunpack.c.l.b16 %v51
    %v91 = vunpack.c.l.b16 %v52
    %v92 = vunpack.c.l.b16 %v53
    %v93 = vunpack.c.l.b16 %v54
    %v94 = vunpack.c.l.b16 %v55
    %v95 = vunpack.c.l.b16 %v56
    %v96 = vpack.c.b16 %v81, %v80
    %v97 = vpack.c.b16 %v83, %v82
    %v98 = vpack.c.b16 %v85, %v84
    %v99 = vpack.c.b16 %v87, %v86
    %v100 = vpack.c.b16 %v89, %v88
    %v101 = vpack.c.b16 %v91, %v90
    %v102 = vpack.c.b16 %v93, %v92
    %v103 = vpack.c.b16 %v95, %v94
    %112 = vmatprep.subr.bf16.mxu0 0
    %113 = vmatpush1.bf16.msra.mxu0 %v96
    %114 = vmatprep.subr.bf16.mxu0 0
    %115 = vmatpush1.bf16.msra.mxu0 %v97
    %116 = vmatprep.subr.bf16.mxu0 0
    %117 = vmatpush1.bf16.msra.mxu0 %v98
    %118 = vmatprep.subr.bf16.mxu0 0
    %119 = vmatpush1.bf16.msra.mxu0 %v99
    %120 = vmatprep.subr.bf16.mxu0 0
    %121 = vmatpush1.bf16.msra.mxu0 %v100
    %122 = vmatprep.subr.bf16.mxu0 0
    %123 = vmatpush1.bf16.msra.mxu0 %v101
    %124 = vmatprep.subr.bf16.mxu0 0
    %125 = vmatpush1.bf16.msra.mxu0 %v102
    %126 = vmatprep.subr.bf16.mxu0 0
    %127 = vmatpush1.bf16.msra.mxu0 %v103
    %128 = vmatprep.subr.bf16.mxu0 0
    %129 = vmatpush1.bf16.msra.mxu0 0
    %130 = vmatprep.subr.bf16.mxu0 0
    %131 = vmatpush1.bf16.msra.mxu0 0
    %132 = vmatprep.subr.bf16.mxu0 0
    %133 = vmatpush1.bf16.msra.mxu0 0
    %134 = vmatprep.subr.bf16.mxu0 0
    %135 = vmatpush1.bf16.msra.mxu0 0
    %136 = vmatprep.subr.bf16.mxu0 0
    %137 = vmatpush1.bf16.msra.mxu0 0
    %138 = vmatprep.subr.bf16.mxu0 0
    %139 = vmatpush1.bf16.msra.mxu0 0
    %140 = vmatprep.subr.bf16.mxu0 0
    %141 = vmatpush1.bf16.msra.mxu0 0
    %142 = vmatprep.subr.bf16.mxu0 0
    %143 = vmatpush1.bf16.msra.mxu0 0
    %144 = vmatprep.mubr.bf16.mxu0 0
    %145 = vmatmul.mubr.bf16.gmra.mrb[0].mxu0 %v40
    %v146 = vpop.f32.mrb[0].mxu0
    %v147 = vadd.f32 %v62, %v146
    %v148 = vpop.f32.mrb[0].mxu0
    %v149 = vpop.f32.mrb[0].mxu0
    %v150 = vpop.f32.mrb[0].mxu0
    %151 = vdwg.mxu0
    %v152 = vld [vmem:[%s3] sm:$0x1]
    %v154 = vlaneseq
    %v155 = vshrl.u32 %v154, 7
    %v156 = vsub.s32 0, %v155
    %v157 = vrot.slane %v152, %v156
    %v159 = vmul.f32 %v147, %v157
    %v160 = vld [vmem:[%s4] sm:$0x1]
    %v162 = vlaneseq
    %v163 = vshrl.u32 %v162, 7
    %v164 = vsub.s32 0, %v163
    %v165 = vrot.slane %v160, %v164
    %v167 = vadd.f32 %v159, %v165
    %v168 = vmul.f32 %v167, 0.5
    %v169 = vmul.f32 %v167, 0.70710677
    %v170 = verf.f32.pop %v169
    %v171 = vadd.f32 %v170, 1.0
    %v172 = vmul.f32 %v168, %v171
    %v173 = vpack.c.bf16 %v172, %v172
    %v174 = vld [vmem:[%s5] sm:$0xf]
    %v175 = vld [vmem:[%s5 + $0x4] sm:$0xf]
    %v176 = vld [vmem:[%s5 + $0x8] sm:$0xf]
    %v177 = vld [vmem:[%s5 + $0xc] sm:$0xf]
    %v178 = vld [vmem:[%s5 + $0x10] sm:$0xf]
    %v179 = vld [vmem:[%s5 + $0x14] sm:$0xf]
    %v180 = vld [vmem:[%s5 + $0x18] sm:$0xf]
    %v181 = vld [vmem:[%s5 + $0x1c] sm:$0xf]
    %v182 = vld [vmem:[%s5 + $0x20] sm:$0xf]
    %v183 = vld [vmem:[%s5 + $0x24] sm:$0xf]
    %v184 = vld [vmem:[%s5 + $0x28] sm:$0xf]
    %v185 = vld [vmem:[%s5 + $0x2c] sm:$0xf]
    %v186 = vld [vmem:[%s5 + $0x30] sm:$0xf]
    %v187 = vld [vmem:[%s5 + $0x34] sm:$0xf]
    %v188 = vld [vmem:[%s5 + $0x38] sm:$0xf]
    %v189 = vld [vmem:[%s5 + $0x3c] sm:$0xf]
    %v190 = vld [vmem:[%s6] sm:$0x1]
    %v192 = vlaneseq
    %v193 = vshrl.u32 %v192, 7
    %v194 = vsub.s32 0, %v193
    %v195 = vrot.slane %v190, %v194
    %v213 = vunpack.c.l.b16 %v174
    %v214 = vunpack.c.l.b16 %v175
    %v215 = vunpack.c.l.b16 %v176
    %v216 = vunpack.c.l.b16 %v177
    %v217 = vunpack.c.l.b16 %v178
    %v218 = vunpack.c.l.b16 %v179
    %v219 = vunpack.c.l.b16 %v180
    %v220 = vunpack.c.l.b16 %v181
    %v221 = vunpack.c.l.b16 %v182
    %v222 = vunpack.c.l.b16 %v183
    %v223 = vunpack.c.l.b16 %v184
    %v224 = vunpack.c.l.b16 %v185
    %v225 = vunpack.c.l.b16 %v186
    %v226 = vunpack.c.l.b16 %v187
    %v227 = vunpack.c.l.b16 %v188
    %v228 = vunpack.c.l.b16 %v189
    %v229 = vpack.c.b16 %v214, %v213
    %v230 = vpack.c.b16 %v216, %v215
    %v231 = vpack.c.b16 %v218, %v217
    %v232 = vpack.c.b16 %v220, %v219
    %v233 = vpack.c.b16 %v222, %v221
    %v234 = vpack.c.b16 %v224, %v223
    %v235 = vpack.c.b16 %v226, %v225
    %v236 = vpack.c.b16 %v228, %v227
    %245 = vmatprep.subr.bf16.mxu0 0
    %246 = vmatpush1.bf16.msra.mxu0 %v229
    %247 = vmatprep.subr.bf16.mxu0 0
    %248 = vmatpush1.bf16.msra.mxu0 %v230
    %249 = vmatprep.subr.bf16.mxu0 0
    %250 = vmatpush1.bf16.msra.mxu0 %v231
    %251 = vmatprep.subr.bf16.mxu0 0
    %252 = vmatpush1.bf16.msra.mxu0 %v232
    %253 = vmatprep.subr.bf16.mxu0 0
    %254 = vmatpush1.bf16.msra.mxu0 %v233
    %255 = vmatprep.subr.bf16.mxu0 0
    %256 = vmatpush1.bf16.msra.mxu0 %v234
    %257 = vmatprep.subr.bf16.mxu0 0
    %258 = vmatpush1.bf16.msra.mxu0 %v235
    %259 = vmatprep.subr.bf16.mxu0 0
    %260 = vmatpush1.bf16.msra.mxu0 %v236
    %261 = vmatprep.subr.bf16.mxu0 0
    %262 = vmatpush1.bf16.msra.mxu0 0
    %263 = vmatprep.subr.bf16.mxu0 0
    %264 = vmatpush1.bf16.msra.mxu0 0
    %265 = vmatprep.subr.bf16.mxu0 0
    %266 = vmatpush1.bf16.msra.mxu0 0
    %267 = vmatprep.subr.bf16.mxu0 0
    %268 = vmatpush1.bf16.msra.mxu0 0
    %269 = vmatprep.subr.bf16.mxu0 0
    %270 = vmatpush1.bf16.msra.mxu0 0
    %271 = vmatprep.subr.bf16.mxu0 0
    %272 = vmatpush1.bf16.msra.mxu0 0
    %273 = vmatprep.subr.bf16.mxu0 0
    %274 = vmatpush1.bf16.msra.mxu0 0
    %275 = vmatprep.subr.bf16.mxu0 0
    %276 = vmatpush1.bf16.msra.mxu0 0
    %277 = vmatprep.mubr.bf16.mxu0 0
    %278 = vmatmul.mubr.bf16.gmra.mrb[0].mxu0 %v173
    %v279 = vpop.f32.mrb[0].mxu0
    %v280 = vadd.f32 %v195, %v279
    %v281 = vpop.f32.mrb[0].mxu0
    %v282 = vpop.f32.mrb[0].mxu0
    %v283 = vpop.f32.mrb[0].mxu0
    %284 = vdwg.mxu0
    %v285 = vpack.c.bf16 %v280, %v280
    %v286 = vld [vmem:[%s7] sm:$0xf]
    %v287 = vld [vmem:[%s7 + $0x4] sm:$0xf]
    %v288 = vld [vmem:[%s7 + $0x8] sm:$0xf]
    %v289 = vld [vmem:[%s7 + $0xc] sm:$0xf]
    %v290 = vld [vmem:[%s7 + $0x10] sm:$0xf]
    %v291 = vld [vmem:[%s7 + $0x14] sm:$0xf]
    %v292 = vld [vmem:[%s7 + $0x18] sm:$0xf]
    %v293 = vld [vmem:[%s7 + $0x1c] sm:$0xf]
    %v294 = vld [vmem:[%s7 + $0x20] sm:$0xf]
    %v295 = vld [vmem:[%s7 + $0x24] sm:$0xf]
    %v296 = vld [vmem:[%s7 + $0x28] sm:$0xf]
    %v297 = vld [vmem:[%s7 + $0x2c] sm:$0xf]
    %v298 = vld [vmem:[%s7 + $0x30] sm:$0xf]
    %v299 = vld [vmem:[%s7 + $0x34] sm:$0xf]
    %v300 = vld [vmem:[%s7 + $0x38] sm:$0xf]
    %v301 = vld [vmem:[%s7 + $0x3c] sm:$0xf]
    %v302 = vld [vmem:[%s8] sm:$0x1]
    %v304 = vlaneseq
    %v305 = vshrl.u32 %v304, 7
    %v306 = vsub.s32 0, %v305
    %v307 = vrot.slane %v302, %v306
    %v325 = vunpack.c.l.b16 %v286
    %v326 = vunpack.c.l.b16 %v287
    %v327 = vunpack.c.l.b16 %v288
    %v328 = vunpack.c.l.b16 %v289
    %v329 = vunpack.c.l.b16 %v290
    %v330 = vunpack.c.l.b16 %v291
    %v331 = vunpack.c.l.b16 %v292
    %v332 = vunpack.c.l.b16 %v293
    %v333 = vunpack.c.l.b16 %v294
    %v334 = vunpack.c.l.b16 %v295
    %v335 = vunpack.c.l.b16 %v296
    %v336 = vunpack.c.l.b16 %v297
    %v337 = vunpack.c.l.b16 %v298
    %v338 = vunpack.c.l.b16 %v299
    %v339 = vunpack.c.l.b16 %v300
    %v340 = vunpack.c.l.b16 %v301
    %v341 = vpack.c.b16 %v326, %v325
    %v342 = vpack.c.b16 %v328, %v327
    %v343 = vpack.c.b16 %v330, %v329
    %v344 = vpack.c.b16 %v332, %v331
    %v345 = vpack.c.b16 %v334, %v333
    %v346 = vpack.c.b16 %v336, %v335
    %v347 = vpack.c.b16 %v338, %v337
    %v348 = vpack.c.b16 %v340, %v339
    %357 = vmatprep.subr.bf16.mxu0 0
    %358 = vmatpush1.bf16.msra.mxu0 %v341
    %359 = vmatprep.subr.bf16.mxu0 0
    %360 = vmatpush1.bf16.msra.mxu0 %v342
    %361 = vmatprep.subr.bf16.mxu0 0
    %362 = vmatpush1.bf16.msra.mxu0 %v343
    %363 = vmatprep.subr.bf16.mxu0 0
    %364 = vmatpush1.bf16.msra.mxu0 %v344
    %365 = vmatprep.subr.bf16.mxu0 0
    %366 = vmatpush1.bf16.msra.mxu0 %v345
    %367 = vmatprep.subr.bf16.mxu0 0
    %368 = vmatpush1.bf16.msra.mxu0 %v346
    %369 = vmatprep.subr.bf16.mxu0 0
    %370 = vmatpush1.bf16.msra.mxu0 %v347
    %371 = vmatprep.subr.bf16.mxu0 0
    %372 = vmatpush1.bf16.msra.mxu0 %v348
    %373 = vmatprep.subr.bf16.mxu0 0
    %374 = vmatpush1.bf16.msra.mxu0 0
    %375 = vmatprep.subr.bf16.mxu0 0
    %376 = vmatpush1.bf16.msra.mxu0 0
    %377 = vmatprep.subr.bf16.mxu0 0
    %378 = vmatpush1.bf16.msra.mxu0 0
    %379 = vmatprep.subr.bf16.mxu0 0
    %380 = vmatpush1.bf16.msra.mxu0 0
    %381 = vmatprep.subr.bf16.mxu0 0
    %382 = vmatpush1.bf16.msra.mxu0 0
    %383 = vmatprep.subr.bf16.mxu0 0
    %384 = vmatpush1.bf16.msra.mxu0 0
    %385 = vmatprep.subr.bf16.mxu0 0
    %386 = vmatpush1.bf16.msra.mxu0 0
    %387 = vmatprep.subr.bf16.mxu0 0
    %388 = vmatpush1.bf16.msra.mxu0 0
    %389 = vmatprep.mubr.bf16.mxu0 0
    %390 = vmatmul.mubr.bf16.gmra.mrb[0].mxu0 %v285
    %v391 = vpop.f32.mrb[0].mxu0
    %v392 = vadd.f32 %v307, %v391
    %v393 = vpop.f32.mrb[0].mxu0
    %v394 = vpop.f32.mrb[0].mxu0
    %v395 = vpop.f32.mrb[0].mxu0
    %396 = vdwg.mxu0
    %v397 = vadd.f32 %v392, %v172
    %v398 = vmul.f32 %v397, 0.5
    %v399 = vmul.f32 %v397, 0.70710677
    %v400 = verf.f32.pop %v399
    %v401 = vadd.f32 %v400, 1.0
    %v402 = vmul.f32 %v398, %v401
    %v403 = vpack.c.bf16 %v402, %v402
    %v404 = vld [vmem:[%s9] sm:$0xf]
    %v405 = vld [vmem:[%s9 + $0x4] sm:$0xf]
    %v406 = vld [vmem:[%s9 + $0x8] sm:$0xf]
    %v407 = vld [vmem:[%s9 + $0xc] sm:$0xf]
    %v408 = vld [vmem:[%s9 + $0x10] sm:$0xf]
    %v409 = vld [vmem:[%s9 + $0x14] sm:$0xf]
    %v410 = vld [vmem:[%s9 + $0x18] sm:$0xf]
    %v411 = vld [vmem:[%s9 + $0x1c] sm:$0xf]
    %v412 = vld [vmem:[%s9 + $0x20] sm:$0xf]
    %v413 = vld [vmem:[%s9 + $0x24] sm:$0xf]
    %v414 = vld [vmem:[%s9 + $0x28] sm:$0xf]
    %v415 = vld [vmem:[%s9 + $0x2c] sm:$0xf]
    %v416 = vld [vmem:[%s9 + $0x30] sm:$0xf]
    %v417 = vld [vmem:[%s9 + $0x34] sm:$0xf]
    %v418 = vld [vmem:[%s9 + $0x38] sm:$0xf]
    %v419 = vld [vmem:[%s9 + $0x3c] sm:$0xf]
    %v420 = vld [vmem:[%s10] sm:$0x1]
    %v422 = vlaneseq
    %v423 = vshrl.u32 %v422, 7
    %v424 = vsub.s32 0, %v423
    %v425 = vrot.slane %v420, %v424
    %v443 = vunpack.c.l.b16 %v404
    %v444 = vunpack.c.l.b16 %v405
    %v445 = vunpack.c.l.b16 %v406
    %v446 = vunpack.c.l.b16 %v407
    %v447 = vunpack.c.l.b16 %v408
    %v448 = vunpack.c.l.b16 %v409
    %v449 = vunpack.c.l.b16 %v410
    %v450 = vunpack.c.l.b16 %v411
    %v451 = vunpack.c.l.b16 %v412
    %v452 = vunpack.c.l.b16 %v413
    %v453 = vunpack.c.l.b16 %v414
    %v454 = vunpack.c.l.b16 %v415
    %v455 = vunpack.c.l.b16 %v416
    %v456 = vunpack.c.l.b16 %v417
    %v457 = vunpack.c.l.b16 %v418
    %v458 = vunpack.c.l.b16 %v419
    %v459 = vpack.c.b16 %v444, %v443
    %v460 = vpack.c.b16 %v446, %v445
    %v461 = vpack.c.b16 %v448, %v447
    %v462 = vpack.c.b16 %v450, %v449
    %v463 = vpack.c.b16 %v452, %v451
    %v464 = vpack.c.b16 %v454, %v453
    %v465 = vpack.c.b16 %v456, %v455
    %v466 = vpack.c.b16 %v458, %v457
    %475 = vmatprep.subr.bf16.mxu0 0
    %476 = vmatpush1.bf16.msra.mxu0 %v459
    %477 = vmatprep.subr.bf16.mxu0 0
    %478 = vmatpush1.bf16.msra.mxu0 %v460
    %479 = vmatprep.subr.bf16.mxu0 0
    %480 = vmatpush1.bf16.msra.mxu0 %v461
    %481 = vmatprep.subr.bf16.mxu0 0
    %482 = vmatpush1.bf16.msra.mxu0 %v462
    %483 = vmatprep.subr.bf16.mxu0 0
    %484 = vmatpush1.bf16.msra.mxu0 %v463
    %485 = vmatprep.subr.bf16.mxu0 0
    %486 = vmatpush1.bf16.msra.mxu0 %v464
    %487 = vmatprep.subr.bf16.mxu0 0
    %488 = vmatpush1.bf16.msra.mxu0 %v465
    %489 = vmatprep.subr.bf16.mxu0 0
    %490 = vmatpush1.bf16.msra.mxu0 %v466
    %491 = vmatprep.subr.bf16.mxu0 0
    %492 = vmatpush1.bf16.msra.mxu0 0
    %493 = vmatprep.subr.bf16.mxu0 0
    %494 = vmatpush1.bf16.msra.mxu0 0
    %495 = vmatprep.subr.bf16.mxu0 0
    %496 = vmatpush1.bf16.msra.mxu0 0
    %497 = vmatprep.subr.bf16.mxu0 0
    %498 = vmatpush1.bf16.msra.mxu0 0
    %499 = vmatprep.subr.bf16.mxu0 0
    %500 = vmatpush1.bf16.msra.mxu0 0
    %501 = vmatprep.subr.bf16.mxu0 0
    %502 = vmatpush1.bf16.msra.mxu0 0
    %503 = vmatprep.subr.bf16.mxu0 0
    %504 = vmatpush1.bf16.msra.mxu0 0
    %505 = vmatprep.subr.bf16.mxu0 0
    %506 = vmatpush1.bf16.msra.mxu0 0
    %507 = vmatprep.mubr.bf16.mxu0 0
    %508 = vmatmul.mubr.bf16.gmra.mrb[0].mxu0 %v403
    %v509 = vpop.f32.mrb[0].mxu0
    %v510 = vadd.f32 %v425, %v509
    %v511 = vpop.f32.mrb[0].mxu0
    %v512 = vpop.f32.mrb[0].mxu0
    %v513 = vpop.f32.mrb[0].mxu0
    %514 = vdwg.mxu0
    %515 = vst [vmem:[#allocation2] sm:$0xff] %v510
    // Predicated region
    $region46: #{linked_autoencoder.3} parent=1 // pred_check
      _
    $region47: #{linked_autoencoder.3} parent=1 // pred_check_branch
      %517 = sbr.rel (0) target = $region49
    $region48: #{linked_autoencoder.3} parent=1 // pred_region
      %s519 = ssub.s32 128, 128
      %520 = vsyncadd [#allocation3], %s519
      %s522 = sshll.u32 [#allocation2], 4
      %s523 = int_to_ptr.vmem [resolvable:$true] %s522
      %525 = dma.vmem_to_hbm [thread:$0]  %s523, 128, %s11, [#allocation3]
    $region49: #{linked_autoencoder.3} parent=1 // pred_fallthru
      _
    // Predicated region
    $region50: #{linked_autoencoder.3} parent=1 // pred_check
      _
    $region51: #{linked_autoencoder.3} parent=1 // pred_check_branch
      %527 = sbr.rel (0) target = $region53
    $region52: #{linked_autoencoder.3} parent=1 // pred_region
      %528 = dma.done [#allocation3], 128
    $region53: #{linked_autoencoder.3} parent=1 // pred_fallthru
      _
    %529 = vsyncpa [#allocation3], 1

</llo_original>
